<compile_context>
chip_gen: v7x
topology: tpu7x:2x2x1
jax: 0.10.0
libtpu: 0.0.40
codegen_flags: <defaults>
</compile_context>

<pallas_src>
import functools

import jax
import jax.numpy as jnp
from jax.experimental import pallas as pl
from jax.experimental.pallas import tpu as pltpu


def _round_up(x, m):
    return (x + m - 1) // m * m


def _adversary_kernel(noise_ref, w1_ref, b1_ref, w2_ref, b2_ref, w3_ref, b3_ref,
                      *rest, rescale):
    """One batch tile: 3-layer MLP with ReLU/ReLU/tanh (+ optional affine rescale)."""
    if rescale:
        scale_ref, shift_ref, out_ref = rest
    else:
        (out_ref,) = rest

    # fc1 + ReLU  (f32 operands; K = noise_dim is tiny so this is essentially free)
    x = noise_ref[...]                                                    # (tb, noise_dim) f32
    h1 = jnp.dot(x, w1_ref[...], preferred_element_type=jnp.float32) + b1_ref[...]
    h1 = jnp.maximum(h1, 0.0)

    # fc2 + ReLU  (bf16 operands on the MXU, f32 accumulation — the one big matmul)
    h2 = jnp.dot(h1.astype(jnp.bfloat16), w2_ref[...],
                 preferred_element_type=jnp.float32) + b2_ref[...]
    h2 = jnp.maximum(h2, 0.0)

    # fc3 + tanh  (f32 operands; w3 is (H, state_dim) -> tiny)
    raw = jnp.tanh(jnp.dot(h2, w3_ref[...], preferred_element_type=jnp.float32)
                   + b3_ref[...])

    if rescale:
        # 0.5*(raw+1)*(hi-lo)+lo  ==  raw*scale + shift  with scale/shift hoisted.
        out = raw * scale_ref[...] + shift_ref[...]
    else:
        out = raw
    out_ref[...] = out.astype(out_ref.dtype)


def prepare_params(params, state_bounds=None):
    """One-time prep: pad hidden dims to a multiple of 128, cast w2 to bf16,
    hoist the rescale algebra.  Zero-padding keeps the math exact (ReLU(0)=0,
    padded rows/cols contribute 0)."""
    noise_dim, hidden_dim = params["w1"].shape
    state_dim = params["w3"].shape[1]
    h_p = _round_up(hidden_dim, 128)
    dh = h_p - hidden_dim

    def bias(b, cols):
        b = jnp.asarray(b, jnp.float32).reshape(1, -1)
        return jnp.pad(b, ((0, 0), (0, cols - b.shape[1])))

    prepared = {
        "w1": jnp.pad(jnp.asarray(params["w1"], jnp.float32), ((0, 0), (0, dh))),
        "b1": bias(params["b1"], h_p),
        "w2": jnp.pad(jnp.asarray(params["w2"], jnp.bfloat16), ((0, dh), (0, dh))),
        "b2": bias(params["b2"], h_p),
        "w3": jnp.pad(jnp.asarray(params["w3"], jnp.float32), ((0, dh), (0, 0))),
        "b3": bias(params["b3"], state_dim),
        "scale": None,
        "shift": None,
    }
    if state_bounds is not None:
        lo = jnp.asarray(state_bounds[0], jnp.float32).reshape(1, state_dim)
        hi = jnp.asarray(state_bounds[1], jnp.float32).reshape(1, state_dim)
        prepared["scale"] = 0.5 * (hi - lo)
        prepared["shift"] = 0.5 * (hi + lo)
    return prepared


def _choose_batch_tile(B, batch_tile):
    """Pick a batch tile.  Small B -> single full-batch block (block == full dim is
    always legal).  Otherwise a multiple of 8, capped so there are >=2 grid steps
    (keeps v7x's second TensorCore busy via the 'parallel' batch axis)."""
    if B < 16:
        return B
    batch_tile = max(8, (batch_tile // 8) * 8)
    half = _round_up(pl.cdiv(B, 2), 8)
    return min(batch_tile, half)


@functools.partial(jax.jit, static_argnames=("batch_tile", "out_dtype"))
def adversary_forward(noise, prepared, *, batch_tile=2048, out_dtype=jnp.float32):
    """Forward pass of AdversaryNetwork via one batch-tiled fused Pallas kernel.

    noise:    (B, noise_dim) float array (streamed, unpadded)
    prepared: output of prepare_params (weights VMEM-resident via constant index_map)
    """
    noise = jnp.asarray(noise, jnp.float32)
    B, noise_dim = noise.shape
    h_p = prepared["w1"].shape[1]
    state_dim = prepared["w3"].shape[1]
    rescale = prepared["scale"] is not None

    tb = _choose_batch_tile(B, batch_tile)
    grid = (pl.cdiv(B, tb),)   # ragged tail block handled by Pallas; OOB rows unused

    # Streamed tensors move per grid step; weights/biases use a constant index_map
    # so they are DMA'd once and stay VMEM-resident across the whole grid.
    in_specs = [
        pl.BlockSpec((tb, noise_dim), lambda i: (i, 0)),    # noise tile (lane = full dim)
        pl.BlockSpec((noise_dim, h_p), lambda i: (0, 0)),   # w1 (resident)
        pl.BlockSpec((1, h_p), lambda i: (0, 0)),           # b1
        pl.BlockSpec((h_p, h_p), lambda i: (0, 0)),         # w2 (bf16, resident)
        pl.BlockSpec((1, h_p), lambda i: (0, 0)),           # b2
        pl.BlockSpec((h_p, state_dim), lambda i: (0, 0)),   # w3
        pl.BlockSpec((1, state_dim), lambda i: (0, 0)),     # b3
    ]
    inputs = [noise, prepared["w1"], prepared["b1"], prepared["w2"],
              prepared["b2"], prepared["w3"], prepared["b3"]]

    if rescale:
        in_specs += [pl.BlockSpec((1, state_dim), lambda i: (0, 0)),
                     pl.BlockSpec((1, state_dim), lambda i: (0, 0))]
        inputs += [prepared["scale"], prepared["shift"]]

    return pl.pallas_call(
        functools.partial(_adversary_kernel, rescale=rescale),
        out_shape=jax.ShapeDtypeStruct((B, state_dim), out_dtype),
        grid=grid,
        in_specs=in_specs,
        out_specs=pl.BlockSpec((tb, state_dim), lambda i: (i, 0)),
        compiler_params=pltpu.CompilerParams(
            dimension_semantics=("parallel",),      # shard batch tiles across TCs (v7x)
            vmem_limit_bytes=48 * 1024 * 1024,      # big tiles on v5e's 16 MiB default
        ),
    )(*inputs)


def init_params(key, noise_dim, state_dim, hidden_dim):
    """Deterministic init mimicking nn.Linear's fan-in uniform scaling."""
    ks = jax.random.split(key, 6)

    def lin(kw, kb, fan_in, fan_out):
        bound = 1.0 / jnp.sqrt(fan_in)
        w = jax.random.uniform(kw, (fan_in, fan_out), jnp.float32, -bound, bound)
        b = jax.random.uniform(kb, (1, fan_out), jnp.float32, -bound, bound)
        return w, b

    w1, b1 = lin(ks[0], ks[1], noise_dim, hidden_dim)
    w2, b2 = lin(ks[2], ks[3], hidden_dim, hidden_dim)
    w3, b3 = lin(ks[4], ks[5], hidden_dim, state_dim)
    return {"w1": w1, "b1": b1, "w2": w2, "b2": b2, "w3": w3, "b3": b3}


def _reference(noise, params, state_bounds=None):
    """Pure-JAX f32 reference matching the PyTorch forward."""
    h1 = jnp.maximum(noise @ params["w1"] + params["b1"], 0.0)
    h2 = jnp.maximum(h1 @ params["w2"] + params["b2"], 0.0)
    raw = jnp.tanh(h2 @ params["w3"] + params["b3"])
    if state_bounds is None:
        return raw
    lo, hi = (jnp.asarray(b, jnp.float32) for b in state_bounds)
    return 0.5 * (raw + 1.0) * (hi - lo) + lo


if __name__ == "__main__":
    key = jax.random.PRNGKey(0)
    k_params, k_noise, k_noise_big = jax.random.split(key, 3)

    batch, noise_dim, hidden_dim, state_dim = 2, 8, 32, 4

    params = init_params(k_params, noise_dim, state_dim, hidden_dim)
    noise = jax.random.normal(k_noise, (batch, noise_dim), jnp.float32)

    bounds = (-2.0 * jnp.ones((state_dim,), jnp.float32),
              3.0 * jnp.ones((state_dim,), jnp.float32))

    # One-time weight prep (padding + bf16 cast hoisted out of the per-call path).
    prep_raw = prepare_params(params, None)
    prep_bnd = prepare_params(params, bounds)

    # Case 1: no state bounds (raw tanh output; rescale skipped at trace time).
    out_raw = jax.block_until_ready(adversary_forward(noise, prep_raw))
    # Case 2: with state bounds (affine rescale to [min_state, max_state]).
    out_scaled = jax.block_until_ready(adversary_forward(noise, prep_bnd))

    ref_raw = _reference(noise, params, None)
    ref_scaled = _reference(noise, params, bounds)
    assert out_raw.shape == (batch, state_dim)
    assert out_scaled.shape == (batch, state_dim)
    assert jnp.allclose(out_raw, ref_raw, atol=5e-2, rtol=5e-2), (out_raw, ref_raw)
    assert jnp.allclose(out_scaled, ref_scaled, atol=5e-2, rtol=5e-2), (out_scaled, ref_scaled)

    # Case 3: multi-tile + ragged tail block (B not a multiple of the tile).
    noise_big = jax.random.normal(k_noise_big, (50, noise_dim), jnp.float32)
    out_big = jax.block_until_ready(
        adversary_forward(noise_big, prep_bnd, batch_tile=32))
    ref_big = _reference(noise_big, params, bounds)
    assert out_big.shape == (50, state_dim)
    assert jnp.allclose(out_big, ref_big, atol=5e-2, rtol=5e-2)

    print("KERNEL_OK")
</pallas_src>

<mosaic_0001>
module attributes {stable_mosaic.version = 11 : i64} {
  func.func @_adversary_kernel(%arg0: i32, %arg1: memref<2x8xf32, #tpu.memory_space<vmem>>, %arg2: memref<8x128xf32, #tpu.memory_space<vmem>>, %arg3: memref<1x128xf32, #tpu.memory_space<vmem>>, %arg4: memref<128x128xbf16, #tpu.memory_space<vmem>>, %arg5: memref<1x128xf32, #tpu.memory_space<vmem>>, %arg6: memref<128x4xf32, #tpu.memory_space<vmem>>, %arg7: memref<1x4xf32, #tpu.memory_space<vmem>>, %arg8: memref<2x4xf32, #tpu.memory_space<vmem>>) attributes {dimension_semantics = [#tpu.dimension_semantics<parallel>], iteration_bounds = array<i64: 1>, scalar_prefetch = 0 : i64, scratch_operands = 0 : i64, tpu.core_type = #tpu.core_type<tc>, window_params = [{transform_indices = @transform_0, window_bounds = array<i64: 2, 8>}, {pipeline_mode = #tpu.pipeline_mode<synchronous>, transform_indices = @transform_1, window_bounds = array<i64: 8, 128>}, {pipeline_mode = #tpu.pipeline_mode<synchronous>, transform_indices = @transform_2, window_bounds = array<i64: 1, 128>}, {pipeline_mode = #tpu.pipeline_mode<synchronous>, transform_indices = @transform_3, window_bounds = array<i64: 128, 128>}, {pipeline_mode = #tpu.pipeline_mode<synchronous>, transform_indices = @transform_4, window_bounds = array<i64: 1, 128>}, {pipeline_mode = #tpu.pipeline_mode<synchronous>, transform_indices = @transform_5, window_bounds = array<i64: 128, 4>}, {pipeline_mode = #tpu.pipeline_mode<synchronous>, transform_indices = @transform_6, window_bounds = array<i64: 1, 4>}, {transform_indices = @transform_7, window_bounds = array<i64: 2, 4>}]} {
    %c0 = arith.constant 0 : index
    %c0_0 = arith.constant 0 : index
    %0 = vector.load %arg1[%c0, %c0_0] : memref<2x8xf32, #tpu.memory_space<vmem>>, vector<2x8xf32>
    %c0_1 = arith.constant 0 : index
    %c0_2 = arith.constant 0 : index
    %1 = vector.load %arg2[%c0_1, %c0_2] : memref<8x128xf32, #tpu.memory_space<vmem>>, vector<8x128xf32>
    %cst = arith.constant dense<0.000000e+00> : vector<2x128xf32>
    %2 = tpu.matmul %0, %1, %cst {dimension_numbers = #tpu.dot_dimension_numbers<[1], [0], [0], [1], [0, 0, 1, 1], [], []>} : vector<2x8xf32>, vector<8x128xf32>, vector<2x128xf32> -> vector<2x128xf32>
    %c0_3 = arith.constant 0 : index
    %c0_4 = arith.constant 0 : index
    %3 = vector.load %arg3[%c0_3, %c0_4] : memref<1x128xf32, #tpu.memory_space<vmem>>, vector<1x128xf32>
    %4 = vector.broadcast %3 : vector<1x128xf32> to vector<2x128xf32>
    %5 = arith.addf %2, %4 : vector<2x128xf32>
    %cst_5 = arith.constant 0.000000e+00 : f32
    %6 = vector.broadcast %cst_5 : f32 to vector<2x128xf32>
    %7 = arith.maximumf %5, %6 : vector<2x128xf32>
    %8 = arith.truncf %7 : vector<2x128xf32> to vector<2x128xbf16>
    %c0_6 = arith.constant 0 : index
    %c0_7 = arith.constant 0 : index
    %9 = vector.load %arg4[%c0_6, %c0_7] : memref<128x128xbf16, #tpu.memory_space<vmem>>, vector<128x128xbf16>
    %cst_8 = arith.constant dense<0.000000e+00> : vector<2x128xf32>
    %10 = tpu.matmul %8, %9, %cst_8 {dimension_numbers = #tpu.dot_dimension_numbers<[1], [0], [0], [1], [0, 0, 1, 1], [], []>} : vector<2x128xbf16>, vector<128x128xbf16>, vector<2x128xf32> -> vector<2x128xf32>
    %c0_9 = arith.constant 0 : index
    %c0_10 = arith.constant 0 : index
    %11 = vector.load %arg5[%c0_9, %c0_10] : memref<1x128xf32, #tpu.memory_space<vmem>>, vector<1x128xf32>
    %12 = vector.broadcast %11 : vector<1x128xf32> to vector<2x128xf32>
    %13 = arith.addf %10, %12 : vector<2x128xf32>
    %cst_11 = arith.constant 0.000000e+00 : f32
    %14 = vector.broadcast %cst_11 : f32 to vector<2x128xf32>
    %15 = arith.maximumf %13, %14 : vector<2x128xf32>
    %c0_12 = arith.constant 0 : index
    %c0_13 = arith.constant 0 : index
    %16 = vector.load %arg6[%c0_12, %c0_13] : memref<128x4xf32, #tpu.memory_space<vmem>>, vector<128x4xf32>
    %cst_14 = arith.constant dense<0.000000e+00> : vector<2x4xf32>
    %17 = tpu.matmul %15, %16, %cst_14 {dimension_numbers = #tpu.dot_dimension_numbers<[1], [0], [0], [1], [0, 0, 1, 1], [], []>} : vector<2x128xf32>, vector<128x4xf32>, vector<2x4xf32> -> vector<2x4xf32>
    %c0_15 = arith.constant 0 : index
    %c0_16 = arith.constant 0 : index
    %18 = vector.load %arg7[%c0_15, %c0_16] : memref<1x4xf32, #tpu.memory_space<vmem>>, vector<1x4xf32>
    %19 = vector.broadcast %18 : vector<1x4xf32> to vector<2x4xf32>
    %20 = arith.addf %17, %19 : vector<2x4xf32>
    %21 = math.tanh %20 : vector<2x4xf32>
    %c0_17 = arith.constant 0 : index
    %c0_18 = arith.constant 0 : index
    %22 = vector.load %arg8[%c0_17, %c0_18] : memref<2x4xf32, #tpu.memory_space<vmem>>, vector<2x4xf32>
    tpu.vector_store %arg8[%c0_17, %c0_18], %21 {strides = array<i32>} : memref<2x4xf32, #tpu.memory_space<vmem>>, vector<2x4xf32>,
    return
  }
  func.func @transform_0(%arg0: i32) -> (i32, i32) {
    %c0_i32 = arith.constant 0 : i32
    %c0_i32_0 = arith.constant 0 : i32
    return %arg0, %c0_i32 : i32, i32
  }
  func.func @transform_1(%arg0: i32) -> (i32, i32) {
    %c0_i32 = arith.constant 0 : i32
    %c0_i32_0 = arith.constant 0 : i32
    %c0_i32_1 = arith.constant 0 : i32
    return %c0_i32, %c0_i32_0 : i32, i32
  }
  func.func @transform_2(%arg0: i32) -> (i32, i32) {
    %c0_i32 = arith.constant 0 : i32
    %c0_i32_0 = arith.constant 0 : i32
    %c0_i32_1 = arith.constant 0 : i32
    return %c0_i32, %c0_i32_0 : i32, i32
  }
  func.func @transform_3(%arg0: i32) -> (i32, i32) {
    %c0_i32 = arith.constant 0 : i32
    %c0_i32_0 = arith.constant 0 : i32
    %c0_i32_1 = arith.constant 0 : i32
    return %c0_i32, %c0_i32_0 : i32, i32
  }
  func.func @transform_4(%arg0: i32) -> (i32, i32) {
    %c0_i32 = arith.constant 0 : i32
    %c0_i32_0 = arith.constant 0 : i32
    %c0_i32_1 = arith.constant 0 : i32
    return %c0_i32, %c0_i32_0 : i32, i32
  }
  func.func @transform_5(%arg0: i32) -> (i32, i32) {
    %c0_i32 = arith.constant 0 : i32
    %c0_i32_0 = arith.constant 0 : i32
    %c0_i32_1 = arith.constant 0 : i32
    return %c0_i32, %c0_i32_0 : i32, i32
  }
  func.func @transform_6(%arg0: i32) -> (i32, i32) {
    %c0_i32 = arith.constant 0 : i32
    %c0_i32_0 = arith.constant 0 : i32
    %c0_i32_1 = arith.constant 0 : i32
    return %c0_i32, %c0_i32_0 : i32, i32
  }
  func.func @transform_7(%arg0: i32) -> (i32, i32) {
    %c0_i32 = arith.constant 0 : i32
    %c0_i32_0 = arith.constant 0 : i32
    return %arg0, %c0_i32 : i32, i32
  }
}

</mosaic_0001>

<llo_original>
// kernel: adversary_forward.1
$region0: #{adversary_forward.1}
  #allocation0 [shape = 'u32[]', space=smem, size = 0x4, offset = 0x4, fixed_abs, tag = 'smem constant byte address 0x4 - core index']
  #allocation1 [shape = 'u32[144,128]{1,0:T(1,128)}', space=vmem, size = 0x12000, scoped, tag = 'internal scratch']
  %s0 = inlined_call_operand.vmem [shape: f32[2,8], index: 0, kind: input, shape index: {}]
  %s1 = inlined_call_operand.vmem [shape: f32[8,128], index: 1, kind: input, shape index: {}]
  %s2 = inlined_call_operand.vmem [shape: f32[1,128], index: 2, kind: input, shape index: {}]
  %s3 = inlined_call_operand.vmem [shape: bf16[128,128], index: 3, kind: input, shape index: {}]
  %s4 = inlined_call_operand.vmem [shape: f32[1,128], index: 4, kind: input, shape index: {}]
  %s5 = inlined_call_operand.vmem [shape: f32[128,4], index: 5, kind: input, shape index: {}]
  %s6 = inlined_call_operand.vmem [shape: f32[1,4], index: 6, kind: input, shape index: {}]
  %s7 = inlined_call_operand.hbm [shape: f32[2,4], index: 7, kind: output, shape index: {}]
  %s8 = sld [smem:[#allocation0]]
  $region38: #{adversary_forward.1} parent=0
    _
  %s10 = ssub.s32 1, %s8
  %s11 = scalar_select 0, %s10, %s8
  $region1: #{adversary_forward.1} parent=0
    #allocation2 [shape = 'u8[1024]{0}', space=vmem, size = 0x400, scoped, tag = 'output window, operand 0, single buffered']
    #allocation3 [shape = 's32[1]{0}', space=sflag, size = 0x4, scoped, tag = 'scoped memory for adversary_forward.1']
    %12 = vsyncpa [#allocation3], 0
    // Predicated region
    $region2: #{adversary_forward.1} parent=1 // pred_check
      _
    $region3: #{adversary_forward.1} parent=1 // pred_check_branch
      %14 = sbr.rel (0) target = $region5
    $region4: #{adversary_forward.1} parent=1 // pred_region
      _
    $region5: #{adversary_forward.1} parent=1 // pred_fallthru
      _
    // Predicated region
    $region6: #{adversary_forward.1} parent=1 // pred_check
      _
    $region7: #{adversary_forward.1} parent=1 // pred_check_branch
      %16 = sbr.rel (0) target = $region9
    $region8: #{adversary_forward.1} parent=1 // pred_region
      _
    $region9: #{adversary_forward.1} parent=1 // pred_fallthru
      _
    // Predicated region
    $region10: #{adversary_forward.1} parent=1 // pred_check
      _
    $region11: #{adversary_forward.1} parent=1 // pred_check_branch
      %18 = sbr.rel (0) target = $region13
    $region12: #{adversary_forward.1} parent=1 // pred_region
      _
    $region13: #{adversary_forward.1} parent=1 // pred_fallthru
      _
    // Predicated region
    $region14: #{adversary_forward.1} parent=1 // pred_check
      _
    $region15: #{adversary_forward.1} parent=1 // pred_check_branch
      %20 = sbr.rel (0) target = $region17
    $region16: #{adversary_forward.1} parent=1 // pred_region
      _
    $region17: #{adversary_forward.1} parent=1 // pred_fallthru
      _
    // Predicated region
    $region18: #{adversary_forward.1} parent=1 // pred_check
      _
    $region19: #{adversary_forward.1} parent=1 // pred_check_branch
      %22 = sbr.rel (0) target = $region21
    $region20: #{adversary_forward.1} parent=1 // pred_region
      _
    $region21: #{adversary_forward.1} parent=1 // pred_fallthru
      _
    // Predicated region
    $region22: #{adversary_forward.1} parent=1 // pred_check
      _
    $region23: #{adversary_forward.1} parent=1 // pred_check_branch
      %24 = sbr.rel (0) target = $region25
    $region24: #{adversary_forward.1} parent=1 // pred_region
      _
    $region25: #{adversary_forward.1} parent=1 // pred_fallthru
      _
    // Predicated region
    $region26: #{adversary_forward.1} parent=1 // pred_check
      _
    $region27: #{adversary_forward.1} parent=1 // pred_check_branch
      %26 = sbr.rel (0) target = $region29
    $region28: #{adversary_forward.1} parent=1 // pred_region
      _
    $region29: #{adversary_forward.1} parent=1 // pred_fallthru
      _
    %v28 = vld [vmem:[%s0] sm:$0x3]
    %v29 = vld [vmem:[%s1] sm:$0xff]
    %v30 = vld [vmem:[%s2] sm:$0x1]
    %v32 = vlaneseq
    %v33 = vshrl.u32 %v32, 7
    %v34 = vsub.s32 0, %v33
    %v35 = vrot.slane %v30, %v34
    %vm37 = vcmask 64512
    %v39 = vsel %vm37, %v28, 0
    %41 = vmatprep.subr.mxu0 0.0
    %42 = vmatpush1.msra.mxu0 %v29
    %43 = vmatprep.subr.mxu0 0.0
    %44 = vmatpush1.msra.mxu0 0.0
    %45 = vmatprep.subr.mxu0 0.0
    %46 = vmatpush1.msra.mxu0 0.0
    %47 = vmatprep.subr.mxu0 0.0
    %48 = vmatpush1.msra.mxu0 0.0
    %49 = vmatprep.subr.mxu0 0.0
    %50 = vmatpush1.msra.mxu0 0.0
    %51 = vmatprep.subr.mxu0 0.0
    %52 = vmatpush1.msra.mxu0 0.0
    %53 = vmatprep.subr.mxu0 0.0
    %54 = vmatpush1.msra.mxu0 0.0
    %55 = vmatprep.subr.mxu0 0.0
    %56 = vmatpush1.msra.mxu0 0.0
    %57 = vmatprep.subr.mxu0 0.0
    %58 = vmatpush1.msra.mxu0 0.0
    %59 = vmatprep.subr.mxu0 0.0
    %60 = vmatpush1.msra.mxu0 0.0
    %61 = vmatprep.subr.mxu0 0.0
    %62 = vmatpush1.msra.mxu0 0.0
    %63 = vmatprep.subr.mxu0 0.0
    %64 = vmatpush1.msra.mxu0 0.0
    %65 = vmatprep.subr.mxu0 0.0
    %66 = vmatpush1.msra.mxu0 0.0
    %67 = vmatprep.subr.mxu0 0.0
    %68 = vmatpush1.msra.mxu0 0.0
    %69 = vmatprep.subr.mxu0 0.0
    %70 = vmatpush1.msra.mxu0 0.0
    %71 = vmatprep.subr.mxu0 0.0
    %72 = vmatpush1.msra.mxu0 0.0
    %73 = vmatprep.subr.mxu0 0.0
    %74 = vmatpush1.msra.mxu0 0.0
    %75 = vmatprep.subr.mxu0 0.0
    %76 = vmatpush1.msra.mxu0 0.0
    %77 = vmatprep.subr.mxu0 0.0
    %78 = vmatpush1.msra.mxu0 0.0
    %79 = vmatprep.subr.mxu0 0.0
    %80 = vmatpush1.msra.mxu0 0.0
    %81 = vmatprep.subr.mxu0 0.0
    %82 = vmatpush1.msra.mxu0 0.0
    %83 = vmatprep.subr.mxu0 0.0
    %84 = vmatpush1.msra.mxu0 0.0
    %85 = vmatprep.subr.mxu0 0.0
    %86 = vmatpush1.msra.mxu0 0.0
    %87 = vmatprep.subr.mxu0 0.0
    %88 = vmatpush1.msra.mxu0 0.0
    %89 = vmatprep.subr.mxu0 0.0
    %90 = vmatpush1.msra.mxu0 0.0
    %91 = vmatprep.subr.mxu0 0.0
    %92 = vmatpush1.msra.mxu0 0.0
    %93 = vmatprep.subr.mxu0 0.0
    %94 = vmatpush1.msra.mxu0 0.0
    %95 = vmatprep.subr.mxu0 0.0
    %96 = vmatpush1.msra.mxu0 0.0
    %97 = vmatprep.subr.mxu0 0.0
    %98 = vmatpush1.msra.mxu0 0.0
    %99 = vmatprep.subr.mxu0 0.0
    %100 = vmatpush1.msra.mxu0 0.0
    %101 = vmatprep.subr.mxu0 0.0
    %102 = vmatpush1.msra.mxu0 0.0
    %103 = vmatprep.subr.mxu0 0.0
    %104 = vmatpush1.msra.mxu0 0.0
    %105 = vmatprep.mubr.f32.mxu0 0.0
    %106 = vmatmul.mubr.f32.gmra.mrb[0].mxu0 %v39
    %v107 = vpop.f32.mrb[0].mxu0
    %v108 = vadd.f32 %v35, %v107
    %v109 = vpop.f32.mrb[0].mxu0
    %110 = vdwg.mxu0
    %v111 = vmax.f32 %v108, 0.0
    %v112 = vpack.c.bf16 %v111, %v111
    %v113 = vld [vmem:[%s3] sm:$0xf]
    %v114 = vld [vmem:[%s3 + $0x4] sm:$0xf]
    %v115 = vld [vmem:[%s3 + $0x8] sm:$0xf]
    %v116 = vld [vmem:[%s3 + $0xc] sm:$0xf]
    %v117 = vld [vmem:[%s3 + $0x10] sm:$0xf]
    %v118 = vld [vmem:[%s3 + $0x14] sm:$0xf]
    %v119 = vld [vmem:[%s3 + $0x18] sm:$0xf]
    %v120 = vld [vmem:[%s3 + $0x1c] sm:$0xf]
    %v121 = vld [vmem:[%s3 + $0x20] sm:$0xf]
    %v122 = vld [vmem:[%s3 + $0x24] sm:$0xf]
    %v123 = vld [vmem:[%s3 + $0x28] sm:$0xf]
    %v124 = vld [vmem:[%s3 + $0x2c] sm:$0xf]
    %v125 = vld [vmem:[%s3 + $0x30] sm:$0xf]
    %v126 = vld [vmem:[%s3 + $0x34] sm:$0xf]
    %v127 = vld [vmem:[%s3 + $0x38] sm:$0xf]
    %v128 = vld [vmem:[%s3 + $0x3c] sm:$0xf]
    %v129 = vld [vmem:[%s4] sm:$0x1]
    %v131 = vlaneseq
    %v132 = vshrl.u32 %v131, 7
    %v133 = vsub.s32 0, %v132
    %v134 = vrot.slane %v129, %v133
    %v152 = vunpack.c.l.b16 %v113
    %v153 = vunpack.c.l.b16 %v114
    %v154 = vunpack.c.l.b16 %v115
    %v155 = vunpack.c.l.b16 %v116
    %v156 = vunpack.c.l.b16 %v117
    %v157 = vunpack.c.l.b16 %v118
    %v158 = vunpack.c.l.b16 %v119
    %v159 = vunpack.c.l.b16 %v120
    %v160 = vunpack.c.l.b16 %v121
    %v161 = vunpack.c.l.b16 %v122
    %v162 = vunpack.c.l.b16 %v123
    %v163 = vunpack.c.l.b16 %v124
    %v164 = vunpack.c.l.b16 %v125
    %v165 = vunpack.c.l.b16 %v126
    %v166 = vunpack.c.l.b16 %v127
    %v167 = vunpack.c.l.b16 %v128
    %v168 = vpack.c.b16 %v153, %v152
    %v169 = vpack.c.b16 %v155, %v154
    %v170 = vpack.c.b16 %v157, %v156
    %v171 = vpack.c.b16 %v159, %v158
    %v172 = vpack.c.b16 %v161, %v160
    %v173 = vpack.c.b16 %v163, %v162
    %v174 = vpack.c.b16 %v165, %v164
    %v175 = vpack.c.b16 %v167, %v166
    %184 = vmatprep.subr.bf16.mxu0 0
    %185 = vmatpush1.bf16.msra.mxu0 %v168
    %186 = vmatprep.subr.bf16.mxu0 0
    %187 = vmatpush1.bf16.msra.mxu0 %v169
    %188 = vmatprep.subr.bf16.mxu0 0
    %189 = vmatpush1.bf16.msra.mxu0 %v170
    %190 = vmatprep.subr.bf16.mxu0 0
    %191 = vmatpush1.bf16.msra.mxu0 %v171
    %192 = vmatprep.subr.bf16.mxu0 0
    %193 = vmatpush1.bf16.msra.mxu0 %v172
    %194 = vmatprep.subr.bf16.mxu0 0
    %195 = vmatpush1.bf16.msra.mxu0 %v173
    %196 = vmatprep.subr.bf16.mxu0 0
    %197 = vmatpush1.bf16.msra.mxu0 %v174
    %198 = vmatprep.subr.bf16.mxu0 0
    %199 = vmatpush1.bf16.msra.mxu0 %v175
    %200 = vmatprep.subr.bf16.mxu0 0
    %201 = vmatpush1.bf16.msra.mxu0 0
    %202 = vmatprep.subr.bf16.mxu0 0
    %203 = vmatpush1.bf16.msra.mxu0 0
    %204 = vmatprep.subr.bf16.mxu0 0
    %205 = vmatpush1.bf16.msra.mxu0 0
    %206 = vmatprep.subr.bf16.mxu0 0
    %207 = vmatpush1.bf16.msra.mxu0 0
    %208 = vmatprep.subr.bf16.mxu0 0
    %209 = vmatpush1.bf16.msra.mxu0 0
    %210 = vmatprep.subr.bf16.mxu0 0
    %211 = vmatpush1.bf16.msra.mxu0 0
    %212 = vmatprep.subr.bf16.mxu0 0
    %213 = vmatpush1.bf16.msra.mxu0 0
    %214 = vmatprep.subr.bf16.mxu0 0
    %215 = vmatpush1.bf16.msra.mxu0 0
    %216 = vmatprep.mubr.bf16.mxu0 0
    %217 = vmatmul.mubr.bf16.gmra.mrb[0].mxu0 %v112
    %v218 = vpop.f32.mrb[0].mxu0
    %v219 = vadd.f32 %v134, %v218
    %v220 = vpop.f32.mrb[0].mxu0
    %v221 = vpop.f32.mrb[0].mxu0
    %v222 = vpop.f32.mrb[0].mxu0
    %223 = vdwg.mxu0
    %v224 = vmax.f32 %v219, 0.0
    %v225 = vld [vmem:[%s5] sm:$0xff]
    %v226 = vld [vmem:[%s5 + $0x8] sm:$0xff]
    %v227 = vld [vmem:[%s5 + $0x10] sm:$0xff]
    %v228 = vld [vmem:[%s5 + $0x18] sm:$0xff]
    %v229 = vld [vmem:[%s5 + $0x20] sm:$0xff]
    %v230 = vld [vmem:[%s5 + $0x28] sm:$0xff]
    %v231 = vld [vmem:[%s5 + $0x30] sm:$0xff]
    %v232 = vld [vmem:[%s5 + $0x38] sm:$0xff]
    %v233 = vld [vmem:[%s5 + $0x40] sm:$0xff]
    %v234 = vld [vmem:[%s5 + $0x48] sm:$0xff]
    %v235 = vld [vmem:[%s5 + $0x50] sm:$0xff]
    %v236 = vld [vmem:[%s5 + $0x58] sm:$0xff]
    %v237 = vld [vmem:[%s5 + $0x60] sm:$0xff]
    %v238 = vld [vmem:[%s5 + $0x68] sm:$0xff]
    %v239 = vld [vmem:[%s5 + $0x70] sm:$0xff]
    %v240 = vld [vmem:[%s5 + $0x78] sm:$0xff]
    %v241 = vld [vmem:[%s6] sm:$0x1]
    %v243 = vlaneseq
    %v244 = vshrl.u32 %v243, 7
    %v245 = vsub.s32 0, %v244
    %v246 = vrot.slane %v241, %v245
    %248 = vmatprep.subr.mxu0 0.0
    %249 = vmatpush1.msra.mxu0 %v225
    %250 = vmatprep.subr.mxu0 0.0
    %251 = vmatpush1.msra.mxu0 %v226
    %252 = vmatprep.subr.mxu0 0.0
    %253 = vmatpush1.msra.mxu0 %v227
    %254 = vmatprep.subr.mxu0 0.0
    %255 = vmatpush1.msra.mxu0 %v228
    %256 = vmatprep.subr.mxu0 0.0
    %257 = vmatpush1.msra.mxu0 %v229
    %258 = vmatprep.subr.mxu0 0.0
    %259 = vmatpush1.msra.mxu0 %v230
    %260 = vmatprep.subr.mxu0 0.0
    %261 = vmatpush1.msra.mxu0 %v231
    %262 = vmatprep.subr.mxu0 0.0
    %263 = vmatpush1.msra.mxu0 %v232
    %264 = vmatprep.subr.mxu0 0.0
    %265 = vmatpush1.msra.mxu0 %v233
    %266 = vmatprep.subr.mxu0 0.0
    %267 = vmatpush1.msra.mxu0 %v234
    %268 = vmatprep.subr.mxu0 0.0
    %269 = vmatpush1.msra.mxu0 %v235
    %270 = vmatprep.subr.mxu0 0.0
    %271 = vmatpush1.msra.mxu0 %v236
    %272 = vmatprep.subr.mxu0 0.0
    %273 = vmatpush1.msra.mxu0 %v237
    %274 = vmatprep.subr.mxu0 0.0
    %275 = vmatpush1.msra.mxu0 %v238
    %276 = vmatprep.subr.mxu0 0.0
    %277 = vmatpush1.msra.mxu0 %v239
    %278 = vmatprep.subr.mxu0 0.0
    %279 = vmatpush1.msra.mxu0 %v240
    %280 = vmatprep.subr.mxu0 0.0
    %281 = vmatpush1.msra.mxu0 0.0
    %282 = vmatprep.subr.mxu0 0.0
    %283 = vmatpush1.msra.mxu0 0.0
    %284 = vmatprep.subr.mxu0 0.0
    %285 = vmatpush1.msra.mxu0 0.0
    %286 = vmatprep.subr.mxu0 0.0
    %287 = vmatpush1.msra.mxu0 0.0
    %288 = vmatprep.subr.mxu0 0.0
    %289 = vmatpush1.msra.mxu0 0.0
    %290 = vmatprep.subr.mxu0 0.0
    %291 = vmatpush1.msra.mxu0 0.0
    %292 = vmatprep.subr.mxu0 0.0
    %293 = vmatpush1.msra.mxu0 0.0
    %294 = vmatprep.subr.mxu0 0.0
    %295 = vmatpush1.msra.mxu0 0.0
    %296 = vmatprep.subr.mxu0 0.0
    %297 = vmatpush1.msra.mxu0 0.0
    %298 = vmatprep.subr.mxu0 0.0
    %299 = vmatpush1.msra.mxu0 0.0
    %300 = vmatprep.subr.mxu0 0.0
    %301 = vmatpush1.msra.mxu0 0.0
    %302 = vmatprep.subr.mxu0 0.0
    %303 = vmatpush1.msra.mxu0 0.0
    %304 = vmatprep.subr.mxu0 0.0
    %305 = vmatpush1.msra.mxu0 0.0
    %306 = vmatprep.subr.mxu0 0.0
    %307 = vmatpush1.msra.mxu0 0.0
    %308 = vmatprep.subr.mxu0 0.0
    %309 = vmatpush1.msra.mxu0 0.0
    %310 = vmatprep.subr.mxu0 0.0
    %311 = vmatpush1.msra.mxu0 0.0
    %312 = vmatprep.mubr.f32.mxu0 0.0
    %313 = vmatmul.mubr.f32.gmra.mrb[0].mxu0 %v224
    %v314 = vpop.f32.mrb[0].mxu0
    %v315 = vadd.f32 %v246, %v314
    %v316 = vpop.f32.mrb[0].mxu0
    %317 = vdwg.mxu0
    %v318 = vtanh.pop %v315
    %vm319 = vcmask 25600
    %320 = vst.msk [vmem:[#allocation2] sm:$0x3] %vm319, %v318
    // Predicated region
    $region30: #{adversary_forward.1} parent=1 // pred_check
      _
    $region31: #{adversary_forward.1} parent=1 // pred_check_branch
      %322 = sbr.rel (0) target = $region33
    $region32: #{adversary_forward.1} parent=1 // pred_region
      %s324 = ssub.s32 32, 32
      %325 = vsyncadd [#allocation3], %s324
      %s327 = sshll.u32 [#allocation2], 4
      %s328 = int_to_ptr.vmem [resolvable:$true] %s327
      %330 = dma.vmem_to_hbm [thread:$0]  %s328, 32, %s7, [#allocation3]
    $region33: #{adversary_forward.1} parent=1 // pred_fallthru
      _
    // Predicated region
    $region34: #{adversary_forward.1} parent=1 // pred_check
      _
    $region35: #{adversary_forward.1} parent=1 // pred_check_branch
      %332 = sbr.rel (0) target = $region37
    $region36: #{adversary_forward.1} parent=1 // pred_region
      %333 = dma.done [#allocation3], 32
    $region37: #{adversary_forward.1} parent=1 // pred_fallthru
      _
    %334 = vsyncpa [#allocation3], 1

</llo_original>
